<compile_context>
chip_gen: v7x
topology: tpu7x:2x2x1
jax: 0.10.0
libtpu: 0.0.40
codegen_flags: <defaults>
</compile_context>

<pallas_src>
import jax
import jax.numpy as jnp
from jax.experimental import pallas as pl
from jax.experimental.pallas import tpu as pltpu


def _round_up(n, m):
    return ((n + m - 1) // m) * m


def _mlp_kernel(x_ref, w1_ref, b1_ref, w2_ref, b2_ref, w3_ref, b3_ref, out_ref):
    # Layer 1: Linear + ReLU  (bf16 MXU inputs, f32 accumulate, f32 epilogue)
    h1 = jnp.dot(x_ref[...], w1_ref[...], preferred_element_type=jnp.float32)
    h1 = jnp.maximum(h1 + b1_ref[...], 0.0)

    # Layer 2: Linear + ReLU
    h2 = jnp.dot(h1.astype(w2_ref.dtype), w2_ref[...],
                 preferred_element_type=jnp.float32)
    h2 = jnp.maximum(h2 + b2_ref[...], 0.0)

    # Layer 3: Linear (logits)
    h3 = jnp.dot(h2.astype(w3_ref.dtype), w3_ref[...],
                 preferred_element_type=jnp.float32)
    out_ref[...] = (h3 + b3_ref[...]).astype(out_ref.dtype)


def prepare_params(params, compute_dtype=jnp.bfloat16):
    """One-time parameter prep (hoisted out of the per-call path).

    Takes PyTorch nn.Linear layout weights (out_features, in_features) and
    returns transposed [in, out], zero-padded to lane-friendly multiples of
    128, cast to bf16 (biases stay f32 for the f32 epilogue).
    """
    H, IN = params["w1"].shape
    OUT = params["w3"].shape[0]
    IN_P = _round_up(IN, 128)
    H_P = _round_up(H, 128)
    OUT_P = _round_up(OUT, 128)

    def pad_w(w_t, rows, cols):
        return jnp.pad(w_t, ((0, rows - w_t.shape[0]), (0, cols - w_t.shape[1]))
                       ).astype(compute_dtype)

    def pad_b(b, cols):
        return jnp.pad(b, (0, cols - b.shape[0])).reshape(1, cols).astype(jnp.float32)

    arrays = {
        "w1": pad_w(params["w1"].T, IN_P, H_P),
        "b1": pad_b(params["b1"], H_P),
        "w2": pad_w(params["w2"].T, H_P, H_P),
        "b2": pad_b(params["b2"], H_P),
        "w3": pad_w(params["w3"].T, H_P, OUT_P),
        "b3": pad_b(params["b3"], OUT_P),
    }
    dims = {"in": IN, "out": OUT, "in_p": IN_P, "h_p": H_P, "out_p": OUT_P}
    return arrays, dims


def dnn_forward(x, prepped, *, batch_tile=128, compute_dtype=jnp.bfloat16):
    """Fused linear-stack forward pass.  x: (B, IN) float32."""
    arrays, dims = prepped
    B, IN = x.shape
    assert IN == dims["in"]
    IN_P, H_P, OUT_P, OUT = dims["in_p"], dims["h_p"], dims["out_p"], dims["out"]

    # Batch tiling: TB is a multiple of 8; pad B up to a multiple of TB.
    if B >= batch_tile:
        TB = batch_tile
    else:
        TB = _round_up(B, 8)
    B_P = _round_up(B, TB)
    n_blocks = B_P // TB

    # Pad x to (B_P, IN_P) and cast to bf16 for the MXU.
    x_p = jnp.pad(x, ((0, B_P - B), (0, IN_P - IN))).astype(compute_dtype)

    # Weights / biases stay resident in VMEM across all grid steps
    # (index_map returns the same block for every i).
    resident = lambda shape: pl.BlockSpec(shape, lambda i: (0, 0))

    out = pl.pallas_call(
        _mlp_kernel,
        out_shape=jax.ShapeDtypeStruct((B_P, OUT_P), jnp.float32),
        grid_spec=pltpu.PrefetchScalarGridSpec(
            num_scalar_prefetch=0,
            grid=(n_blocks,),
            in_specs=[
                pl.BlockSpec((TB, IN_P), lambda i: (i, 0)),   # activation stream
                resident((IN_P, H_P)), resident((1, H_P)),
                resident((H_P, H_P)), resident((1, H_P)),
                resident((H_P, OUT_P)), resident((1, OUT_P)),
            ],
            out_specs=pl.BlockSpec((TB, OUT_P), lambda i: (i, 0)),
        ),
        compiler_params=pltpu.CompilerParams(
            dimension_semantics=("parallel",),
        ),
    )(x_p, arrays["w1"], arrays["b1"], arrays["w2"], arrays["b2"],
      arrays["w3"], arrays["b3"])

    # Slice off the batch / lane padding.
    return out[:B, :OUT]


def _init_params(key, in_dim, hidden, out_dim):
    """Deterministic synthetic parameters (PyTorch nn.Linear shapes)."""
    ks = jax.random.split(key, 6)
    scale = 0.1
    return {
        "w1": scale * jax.random.normal(ks[0], (hidden, in_dim), jnp.float32),
        "b1": scale * jax.random.normal(ks[1], (hidden,), jnp.float32),
        "w2": scale * jax.random.normal(ks[2], (hidden, hidden), jnp.float32),
        "b2": scale * jax.random.normal(ks[3], (hidden,), jnp.float32),
        "w3": scale * jax.random.normal(ks[4], (out_dim, hidden), jnp.float32),
        "b3": scale * jax.random.normal(ks[5], (out_dim,), jnp.float32),
    }


def _reference_forward(x, p):
    """Pure-JAX f32 reference mirroring the PyTorch linear_stack exactly."""
    h = jnp.maximum(x @ p["w1"].T + p["b1"], 0.0)
    h = jnp.maximum(h @ p["w2"].T + p["b2"], 0.0)
    return h @ p["w3"].T + p["b3"]


if __name__ == "__main__":
    # Small but pipeline-exercising shapes: 2 batch tiles of 128 rows.
    B, IN, H, OUT = 256, 32, 64, 10

    key = jax.random.PRNGKey(0)
    k_x, k_p = jax.random.split(key)
    x = jax.random.normal(k_x, (B, IN), jnp.float32)
    params = _init_params(k_p, IN, H, OUT)

    prepped = prepare_params(params)           # one-time prep (hoisted)
    y = dnn_forward(x, prepped)
    y = jax.block_until_ready(y)

    y_ref = _reference_forward(x, params)
    assert y.shape == (B, OUT)
    # bf16 MXU inputs with f32 accumulation: loose tolerance vs. f32 reference.
    assert jnp.allclose(y, y_ref, atol=5e-2, rtol=5e-2), (
        float(jnp.max(jnp.abs(y - y_ref))))

    print("KERNEL_OK")
</pallas_src>

<mosaic_0001>
module attributes {stable_mosaic.version = 11 : i64} {
  func.func @_mlp_kernel(%arg0: i32, %arg1: memref<128x128xbf16, #tpu.memory_space<vmem>>, %arg2: memref<128x128xbf16, #tpu.memory_space<vmem>>, %arg3: memref<1x128xf32, #tpu.memory_space<vmem>>, %arg4: memref<128x128xbf16, #tpu.memory_space<vmem>>, %arg5: memref<1x128xf32, #tpu.memory_space<vmem>>, %arg6: memref<128x128xbf16, #tpu.memory_space<vmem>>, %arg7: memref<1x128xf32, #tpu.memory_space<vmem>>, %arg8: memref<128x128xf32, #tpu.memory_space<vmem>>) attributes {dimension_semantics = [#tpu.dimension_semantics<parallel>], iteration_bounds = array<i64: 2>, scalar_prefetch = 0 : i64, scratch_operands = 0 : i64, tpu.core_type = #tpu.core_type<tc>, window_params = [{transform_indices = @transform_0, window_bounds = array<i64: 128, 128>}, {pipeline_mode = #tpu.pipeline_mode<synchronous>, transform_indices = @transform_1, window_bounds = array<i64: 128, 128>}, {pipeline_mode = #tpu.pipeline_mode<synchronous>, transform_indices = @transform_2, window_bounds = array<i64: 1, 128>}, {pipeline_mode = #tpu.pipeline_mode<synchronous>, transform_indices = @transform_3, window_bounds = array<i64: 128, 128>}, {pipeline_mode = #tpu.pipeline_mode<synchronous>, transform_indices = @transform_4, window_bounds = array<i64: 1, 128>}, {pipeline_mode = #tpu.pipeline_mode<synchronous>, transform_indices = @transform_5, window_bounds = array<i64: 128, 128>}, {pipeline_mode = #tpu.pipeline_mode<synchronous>, transform_indices = @transform_6, window_bounds = array<i64: 1, 128>}, {transform_indices = @transform_7, window_bounds = array<i64: 128, 128>}]} {
    %c0 = arith.constant 0 : index
    %c0_0 = arith.constant 0 : index
    %0 = vector.load %arg1[%c0, %c0_0] : memref<128x128xbf16, #tpu.memory_space<vmem>>, vector<128x128xbf16>
    %c0_1 = arith.constant 0 : index
    %c0_2 = arith.constant 0 : index
    %1 = vector.load %arg2[%c0_1, %c0_2] : memref<128x128xbf16, #tpu.memory_space<vmem>>, vector<128x128xbf16>
    %cst = arith.constant dense<0.000000e+00> : vector<128x128xf32>
    %2 = tpu.matmul %0, %1, %cst {dimension_numbers = #tpu.dot_dimension_numbers<[1], [0], [0], [1], [0, 0, 1, 1], [], []>} : vector<128x128xbf16>, vector<128x128xbf16>, vector<128x128xf32> -> vector<128x128xf32>
    %c0_3 = arith.constant 0 : index
    %c0_4 = arith.constant 0 : index
    %3 = vector.load %arg3[%c0_3, %c0_4] : memref<1x128xf32, #tpu.memory_space<vmem>>, vector<1x128xf32>
    %4 = vector.broadcast %3 : vector<1x128xf32> to vector<128x128xf32>
    %5 = arith.addf %2, %4 : vector<128x128xf32>
    %cst_5 = arith.constant 0.000000e+00 : f32
    %6 = vector.broadcast %cst_5 : f32 to vector<128x128xf32>
    %7 = arith.maximumf %5, %6 : vector<128x128xf32>
    %8 = arith.truncf %7 : vector<128x128xf32> to vector<128x128xbf16>
    %c0_6 = arith.constant 0 : index
    %c0_7 = arith.constant 0 : index
    %9 = vector.load %arg4[%c0_6, %c0_7] : memref<128x128xbf16, #tpu.memory_space<vmem>>, vector<128x128xbf16>
    %cst_8 = arith.constant dense<0.000000e+00> : vector<128x128xf32>
    %10 = tpu.matmul %8, %9, %cst_8 {dimension_numbers = #tpu.dot_dimension_numbers<[1], [0], [0], [1], [0, 0, 1, 1], [], []>} : vector<128x128xbf16>, vector<128x128xbf16>, vector<128x128xf32> -> vector<128x128xf32>
    %c0_9 = arith.constant 0 : index
    %c0_10 = arith.constant 0 : index
    %11 = vector.load %arg5[%c0_9, %c0_10] : memref<1x128xf32, #tpu.memory_space<vmem>>, vector<1x128xf32>
    %12 = vector.broadcast %11 : vector<1x128xf32> to vector<128x128xf32>
    %13 = arith.addf %10, %12 : vector<128x128xf32>
    %cst_11 = arith.constant 0.000000e+00 : f32
    %14 = vector.broadcast %cst_11 : f32 to vector<128x128xf32>
    %15 = arith.maximumf %13, %14 : vector<128x128xf32>
    %16 = arith.truncf %15 : vector<128x128xf32> to vector<128x128xbf16>
    %c0_12 = arith.constant 0 : index
    %c0_13 = arith.constant 0 : index
    %17 = vector.load %arg6[%c0_12, %c0_13] : memref<128x128xbf16, #tpu.memory_space<vmem>>, vector<128x128xbf16>
    %cst_14 = arith.constant dense<0.000000e+00> : vector<128x128xf32>
    %18 = tpu.matmul %16, %17, %cst_14 {dimension_numbers = #tpu.dot_dimension_numbers<[1], [0], [0], [1], [0, 0, 1, 1], [], []>} : vector<128x128xbf16>, vector<128x128xbf16>, vector<128x128xf32> -> vector<128x128xf32>
    %c0_15 = arith.constant 0 : index
    %c0_16 = arith.constant 0 : index
    %19 = vector.load %arg7[%c0_15, %c0_16] : memref<1x128xf32, #tpu.memory_space<vmem>>, vector<1x128xf32>
    %20 = vector.broadcast %19 : vector<1x128xf32> to vector<128x128xf32>
    %21 = arith.addf %18, %20 : vector<128x128xf32>
    %c0_17 = arith.constant 0 : index
    %c0_18 = arith.constant 0 : index
    %22 = vector.load %arg8[%c0_17, %c0_18] : memref<128x128xf32, #tpu.memory_space<vmem>>, vector<128x128xf32>
    tpu.vector_store %arg8[%c0_17, %c0_18], %21 {strides = array<i32>} : memref<128x128xf32, #tpu.memory_space<vmem>>, vector<128x128xf32>,
    return
  }
  func.func @transform_0(%arg0: i32) -> (i32, i32) {
    %c0_i32 = arith.constant 0 : i32
    %c0_i32_0 = arith.constant 0 : i32
    return %arg0, %c0_i32 : i32, i32
  }
  func.func @transform_1(%arg0: i32) -> (i32, i32) {
    %c0_i32 = arith.constant 0 : i32
    %c0_i32_0 = arith.constant 0 : i32
    %c0_i32_1 = arith.constant 0 : i32
    return %c0_i32, %c0_i32_0 : i32, i32
  }
  func.func @transform_2(%arg0: i32) -> (i32, i32) {
    %c0_i32 = arith.constant 0 : i32
    %c0_i32_0 = arith.constant 0 : i32
    %c0_i32_1 = arith.constant 0 : i32
    return %c0_i32, %c0_i32_0 : i32, i32
  }
  func.func @transform_3(%arg0: i32) -> (i32, i32) {
    %c0_i32 = arith.constant 0 : i32
    %c0_i32_0 = arith.constant 0 : i32
    %c0_i32_1 = arith.constant 0 : i32
    return %c0_i32, %c0_i32_0 : i32, i32
  }
  func.func @transform_4(%arg0: i32) -> (i32, i32) {
    %c0_i32 = arith.constant 0 : i32
    %c0_i32_0 = arith.constant 0 : i32
    %c0_i32_1 = arith.constant 0 : i32
    return %c0_i32, %c0_i32_0 : i32, i32
  }
  func.func @transform_5(%arg0: i32) -> (i32, i32) {
    %c0_i32 = arith.constant 0 : i32
    %c0_i32_0 = arith.constant 0 : i32
    %c0_i32_1 = arith.constant 0 : i32
    return %c0_i32, %c0_i32_0 : i32, i32
  }
  func.func @transform_6(%arg0: i32) -> (i32, i32) {
    %c0_i32 = arith.constant 0 : i32
    %c0_i32_0 = arith.constant 0 : i32
    %c0_i32_1 = arith.constant 0 : i32
    return %c0_i32, %c0_i32_0 : i32, i32
  }
  func.func @transform_7(%arg0: i32) -> (i32, i32) {
    %c0_i32 = arith.constant 0 : i32
    %c0_i32_0 = arith.constant 0 : i32
    return %arg0, %c0_i32 : i32, i32
  }
}

</mosaic_0001>

<llo_original>
// kernel: tpu_custom_call.1
$region0: #{tpu_custom_call.1}
  #allocation0 [shape = 'u32[]', space=smem, size = 0x4, offset = 0x4, fixed_abs, tag = 'smem constant byte address 0x4 - core index']
  #allocation1 [shape = 'u32[144,128]{1,0:T(1,128)}', space=vmem, size = 0x12000, scoped, tag = 'internal scratch']
  %s0 = inlined_call_operand.hbm [shape: bf16[256,128], index: 0, kind: input, shape index: {}]
  %s1 = inlined_call_operand.hbm [shape: bf16[128,128], index: 1, kind: input, shape index: {}]
  %s2 = inlined_call_operand.vmem [shape: f32[1,128], index: 2, kind: input, shape index: {}]
  %s3 = inlined_call_operand.hbm [shape: bf16[128,128], index: 3, kind: input, shape index: {}]
  %s4 = inlined_call_operand.vmem [shape: f32[1,128], index: 4, kind: input, shape index: {}]
  %s5 = inlined_call_operand.hbm [shape: bf16[128,128], index: 5, kind: input, shape index: {}]
  %s6 = inlined_call_operand.vmem [shape: f32[1,128], index: 6, kind: input, shape index: {}]
  %s7 = inlined_call_operand.hbm [shape: f32[256,128], index: 7, kind: output, shape index: {}]
  %s8 = sld [smem:[#allocation0]]
  $region77: #{tpu_custom_call.1} parent=0
    _
  %s10 = ssub.s32 1, %s8
  %s11 = scalar_select 0, %s10, %s8
  $region1: #{tpu_custom_call.1} parent=0
    #allocation2 [shape = 'u8[65536]{0}', space=vmem, size = 0x10000, scoped, tag = 'input window, operand 0']
    #allocation3 [shape = 's32[2]{0}', space=sflag, size = 0x8, scoped, tag = 'scoped memory for tpu_custom_call.1']
    #allocation4 [shape = 's32[2]{0}', space=sflag, size = 0x8, scoped, tag = 'scoped memory for tpu_custom_call.1']
    #allocation5 [shape = 'u8[32768]{0}', space=vmem, size = 0x8000, scoped, tag = 'input window, operand 1, single buffered']
    #allocation6 [shape = 's32[1]{0}', space=sflag, size = 0x4, scoped, tag = 'scoped memory for tpu_custom_call.1']
    #allocation7 [shape = 'u8[32768]{0}', space=vmem, size = 0x8000, scoped, tag = 'input window, operand 3, single buffered']
    #allocation8 [shape = 'u8[32768]{0}', space=vmem, size = 0x8000, scoped, tag = 'input window, operand 5, single buffered']
    #allocation9 [shape = 's32[1]{0}', space=sflag, size = 0x4, scoped, tag = 'scoped memory for tpu_custom_call.1']
    #allocation10 [shape = 'u8[131072]{0}', space=vmem, size = 0x20000, scoped, tag = 'output window, operand 0']
    %12 = vsyncpa [#allocation3], 0
    %s13 = scalar_lea.sflag [#allocation3], 1
    %14 = vsyncpa %s13, 0
    %15 = vsyncpa [#allocation6], 0
    %16 = vsyncpa [#allocation9], 0
    %17 = vsyncpa [#allocation4], 0
    %s18 = scalar_lea.sflag [#allocation4], 1
    %19 = vsyncpa %s18, 0
    loop: start=0, step=1, limit=4
    $region2: #{tpu_custom_call.1} parent=1 // loop_pre_header
      _
    $region3: #{tpu_custom_call.1} parent=1 // loop_header
      %s21 = sphi 0, %s25
      %p22 = scmp.ge.s32.totalorder %s21, 4
      %s31 = sphi 0, %s33
      %s34 = sphi 0, %s31
      %s35 = sphi 0, %s34
      %s51 = sphi 0, %s35
      %s55 = sphi 0, %s55
      %s57 = sphi 0, %s55
      %s58 = sphi 0, %s57
      %s72 = sphi 0, %s58
      %s76 = sphi 0, %s76
      %s78 = sphi 0, %s76
      %s79 = sphi 0, %s78
      %s93 = sphi 0, %s79
      %s97 = sphi 0, %s97
      %s99 = sphi 0, %s97
      %s100 = sphi 0, %s99
      %s114 = sphi 0, %s100
      %s118 = sphi 0, %s118
      %s120 = sphi 0, %s118
      %s121 = sphi 0, %s120
      %s135 = sphi 0, %s121
      %s139 = sphi 0, %s139
      %s141 = sphi 0, %s139
      %s142 = sphi 0, %s141
      %s156 = sphi 0, %s142
      %s160 = sphi 0, %s160
      %s162 = sphi 0, %s160
      %s163 = sphi 0, %s162
      %s177 = sphi 0, %s163
      %s183 = sphi 0, %s185
      %s186 = sphi 0, %s183
      %s187 = sphi 0, %s186
      %s203 = sphi 0, %s187
    $region4: #{tpu_custom_call.1} parent=1 // loop_header_branch
      %24 = sbr.rel (%p22) target = $region8
    $region5: #{tpu_custom_call.1} parent=1 // loop_body
      %s26 = ssub.s32 %s21, 1
      %s27 = ssub.s32 %s21, 2
      %s28 = sadd.s32 %s21, 1
      %s29 = ssub.s32 %s21, %s28
      %p30 = scmp.eq.s32.totalorder %s29, 0
      %s32 = sadd.s32 %s31, 1
      %s33 = scalar_select %p30, %s31, %s32
      %p36 = pneg %p30
      %p37 = scmp.eq.s32.totalorder %s21, 1
      %p38 = por %p36, %p37
      %p39 = scmp.ne.s32.totalorder %s31, %s34
      %p40 = scmp.eq.s32.totalorder %s21, 0
      %p41 = por %p39, %p40
      %p42 = scmp.ne.s32.totalorder %s31, %s34
      %p43 = scmp.eq.s32.totalorder %s26, 1
      %p44 = por %p42, %p43
      %p45 = scmp.ne.s32.totalorder %s34, %s35
      %p46 = scmp.eq.s32.totalorder %s26, 0
      %p47 = por %p45, %p46
      %p48 = scmp.ne.s32.totalorder %s34, %s35
      %p49 = scmp.eq.s32.totalorder %s27, 1
      %p50 = por %p48, %p49
      %p52 = scmp.ne.s32.totalorder %s35, %s51
      %p53 = scmp.eq.s32.totalorder %s27, 0
      %p54 = por %p52, %p53
      %s56 = sadd.s32 %s55, 1
      %p59 = scmp.eq.s32.totalorder %s21, 1
      %p60 = scmp.ne.s32.totalorder %s55, %s57
      %p61 = scmp.eq.s32.totalorder %s21, 0
      %p62 = por %p60, %p61
      %p63 = scmp.ne.s32.totalorder %s55, %s57
      %p64 = scmp.eq.s32.totalorder %s26, 1
      %p65 = por %p63, %p64
      %p66 = scmp.ne.s32.totalorder %s57, %s58
      %p67 = scmp.eq.s32.totalorder %s26, 0
      %p68 = por %p66, %p67
      %p69 = scmp.ne.s32.totalorder %s57, %s58
      %p70 = scmp.eq.s32.totalorder %s27, 1
      %p71 = por %p69, %p70
      %p73 = scmp.ne.s32.totalorder %s58, %s72
      %p74 = scmp.eq.s32.totalorder %s27, 0
      %p75 = por %p73, %p74
      %s77 = sadd.s32 %s76, 1
      %p80 = scmp.eq.s32.totalorder %s21, 1
      %p81 = scmp.ne.s32.totalorder %s76, %s78
      %p82 = scmp.eq.s32.totalorder %s21, 0
      %p83 = por %p81, %p82
      %p84 = scmp.ne.s32.totalorder %s76, %s78
      %p85 = scmp.eq.s32.totalorder %s26, 1
      %p86 = por %p84, %p85
      %p87 = scmp.ne.s32.totalorder %s78, %s79
      %p88 = scmp.eq.s32.totalorder %s26, 0
      %p89 = por %p87, %p88
      %p90 = scmp.ne.s32.totalorder %s78, %s79
      %p91 = scmp.eq.s32.totalorder %s27, 1
      %p92 = por %p90, %p91
      %p94 = scmp.ne.s32.totalorder %s79, %s93
      %p95 = scmp.eq.s32.totalorder %s27, 0
      %p96 = por %p94, %p95
      %s98 = sadd.s32 %s97, 1
      %p101 = scmp.eq.s32.totalorder %s21, 1
      %p102 = scmp.ne.s32.totalorder %s97, %s99
      %p103 = scmp.eq.s32.totalorder %s21, 0
      %p104 = por %p102, %p103
      %p105 = scmp.ne.s32.totalorder %s97, %s99
      %p106 = scmp.eq.s32.totalorder %s26, 1
      %p107 = por %p105, %p106
      %p108 = scmp.ne.s32.totalorder %s99, %s100
      %p109 = scmp.eq.s32.totalorder %s26, 0
      %p110 = por %p108, %p109
      %p111 = scmp.ne.s32.totalorder %s99, %s100
      %p112 = scmp.eq.s32.totalorder %s27, 1
      %p113 = por %p111, %p112
      %p115 = scmp.ne.s32.totalorder %s100, %s114
      %p116 = scmp.eq.s32.totalorder %s27, 0
      %p117 = por %p115, %p116
      %s119 = sadd.s32 %s118, 1
      %p122 = scmp.eq.s32.totalorder %s21, 1
      %p123 = scmp.ne.s32.totalorder %s118, %s120
      %p124 = scmp.eq.s32.totalorder %s21, 0
      %p125 = por %p123, %p124
      %p126 = scmp.ne.s32.totalorder %s118, %s120
      %p127 = scmp.eq.s32.totalorder %s26, 1
      %p128 = por %p126, %p127
      %p129 = scmp.ne.s32.totalorder %s120, %s121
      %p130 = scmp.eq.s32.totalorder %s26, 0
      %p131 = por %p129, %p130
      %p132 = scmp.ne.s32.totalorder %s120, %s121
      %p133 = scmp.eq.s32.totalorder %s27, 1
      %p134 = por %p132, %p133
      %p136 = scmp.ne.s32.totalorder %s121, %s135
      %p137 = scmp.eq.s32.totalorder %s27, 0
      %p138 = por %p136, %p137
      %s140 = sadd.s32 %s139, 1
      %p143 = scmp.eq.s32.totalorder %s21, 1
      %p144 = scmp.ne.s32.totalorder %s139, %s141
      %p145 = scmp.eq.s32.totalorder %s21, 0
      %p146 = por %p144, %p145
      %p147 = scmp.ne.s32.totalorder %s139, %s141
      %p148 = scmp.eq.s32.totalorder %s26, 1
      %p149 = por %p147, %p148
      %p150 = scmp.ne.s32.totalorder %s141, %s142
      %p151 = scmp.eq.s32.totalorder %s26, 0
      %p152 = por %p150, %p151
      %p153 = scmp.ne.s32.totalorder %s141, %s142
      %p154 = scmp.eq.s32.totalorder %s27, 1
      %p155 = por %p153, %p154
      %p157 = scmp.ne.s32.totalorder %s142, %s156
      %p158 = scmp.eq.s32.totalorder %s27, 0
      %p159 = por %p157, %p158
      %s161 = sadd.s32 %s160, 1
      %p164 = scmp.eq.s32.totalorder %s21, 1
      %p165 = scmp.ne.s32.totalorder %s160, %s162
      %p166 = scmp.eq.s32.totalorder %s21, 0
      %p167 = por %p165, %p166
      %p168 = scmp.ne.s32.totalorder %s160, %s162
      %p169 = scmp.eq.s32.totalorder %s26, 1
      %p170 = por %p168, %p169
      %p171 = scmp.ne.s32.totalorder %s162, %s163
      %p172 = scmp.eq.s32.totalorder %s26, 0
      %p173 = por %p171, %p172
      %p174 = scmp.ne.s32.totalorder %s162, %s163
      %p175 = scmp.eq.s32.totalorder %s27, 1
      %p176 = por %p174, %p175
      %p178 = scmp.ne.s32.totalorder %s163, %s177
      %p179 = scmp.eq.s32.totalorder %s27, 0
      %p180 = por %p178, %p179
      %s181 = ssub.s32 %s21, %s28
      %p182 = scmp.eq.s32.totalorder %s181, 0
      %s184 = sadd.s32 %s183, 1
      %s185 = scalar_select %p182, %s183, %s184
      %p188 = pneg %p182
      %p189 = scmp.eq.s32.totalorder %s21, 1
      %p190 = por %p188, %p189
      %p191 = scmp.ne.s32.totalorder %s183, %s186
      %p192 = scmp.eq.s32.totalorder %s21, 0
      %p193 = por %p191, %p192
      %p194 = scmp.ne.s32.totalorder %s183, %s186
      %p195 = scmp.eq.s32.totalorder %s26, 1
      %p196 = por %p194, %p195
      %p197 = scmp.ne.s32.totalorder %s186, %s187
      %p198 = scmp.eq.s32.totalorder %s26, 0
      %p199 = por %p197, %p198
      %p200 = scmp.ne.s32.totalorder %s186, %s187
      %p201 = scmp.eq.s32.totalorder %s27, 1
      %p202 = por %p200, %p201
      %p204 = scmp.ne.s32.totalorder %s187, %s203
      %p205 = scmp.eq.s32.totalorder %s27, 0
      %p206 = por %p204, %p205
      %p207 = scmp.le.s32.totalorder 1, %s21
      %p208 = scmp.lt.s32.totalorder %s21, 3
      %p209 = pnand %p207, %p208
      %p210 = pneg %p209
      // Predicated region
      $region9: #{tpu_custom_call.1} parent=5 // pred_check
        _
      $region10: #{tpu_custom_call.1} parent=5 // pred_check_branch
        %212 = sbr.rel (%p209) target = $region12
      $region11: #{tpu_custom_call.1} parent=5 // pred_region
        %s213 = ssub.s32 %s21, 1
        // Predicated region
        $region13: #{tpu_custom_call.1} parent=11 // pred_check
          %p214 = pneg %p68
        $region14: #{tpu_custom_call.1} parent=11 // pred_check_branch
          %216 = sbr.rel (%p214) target = $region16
        $region15: #{tpu_custom_call.1} parent=11 // pred_region
          %s218 = ssub.s32 1024, 1024
          %219 = vsyncadd [#allocation6], %s218
          %s220 = sshll.u32 [#allocation5], 4
          %s221 = int_to_ptr.vmem [resolvable:$true] %s220
          %226 = dma.hbm_to_vmem [thread:$0]  %s1, 1024, %s221, [#allocation6], 64, 64, 4
        $region16: #{tpu_custom_call.1} parent=11 // pred_fallthru
          _
        // Predicated region
        $region17: #{tpu_custom_call.1} parent=11 // pred_check
          %p227 = pneg %p89
        $region18: #{tpu_custom_call.1} parent=11 // pred_check_branch
          %229 = sbr.rel (%p227) target = $region20
        $region19: #{tpu_custom_call.1} parent=11 // pred_region
          _
        $region20: #{tpu_custom_call.1} parent=11 // pred_fallthru
          _
        // Predicated region
        $region21: #{tpu_custom_call.1} parent=11 // pred_check
          %p230 = pneg %p110
        $region22: #{tpu_custom_call.1} parent=11 // pred_check_branch
          %232 = sbr.rel (%p230) target = $region24
        $region23: #{tpu_custom_call.1} parent=11 // pred_region
          %s234 = ssub.s32 1024, 1024
          %235 = vsyncadd [#allocation6], %s234
          %s236 = sshll.u32 [#allocation7], 4
          %s237 = int_to_ptr.vmem [resolvable:$true] %s236
          %242 = dma.hbm_to_vmem [thread:$0]  %s3, 1024, %s237, [#allocation6], 64, 64, 4
        $region24: #{tpu_custom_call.1} parent=11 // pred_fallthru
          _
        // Predicated region
        $region25: #{tpu_custom_call.1} parent=11 // pred_check
          %p243 = pneg %p131
        $region26: #{tpu_custom_call.1} parent=11 // pred_check_branch
          %245 = sbr.rel (%p243) target = $region28
        $region27: #{tpu_custom_call.1} parent=11 // pred_region
          _
        $region28: #{tpu_custom_call.1} parent=11 // pred_fallthru
          _
        // Predicated region
        $region29: #{tpu_custom_call.1} parent=11 // pred_check
          %p246 = pneg %p152
        $region30: #{tpu_custom_call.1} parent=11 // pred_check_branch
          %248 = sbr.rel (%p246) target = $region32
        $region31: #{tpu_custom_call.1} parent=11 // pred_region
          %s250 = ssub.s32 1024, 1024
          %251 = vsyncadd [#allocation9], %s250
          %s252 = sshll.u32 [#allocation8], 4
          %s253 = int_to_ptr.vmem [resolvable:$true] %s252
          %258 = dma.hbm_to_vmem [thread:$0]  %s5, 1024, %s253, [#allocation9], 64, 64, 4
        $region32: #{tpu_custom_call.1} parent=11 // pred_fallthru
          _
        // Predicated region
        $region33: #{tpu_custom_call.1} parent=11 // pred_check
          %p259 = pneg %p173
        $region34: #{tpu_custom_call.1} parent=11 // pred_check_branch
          %261 = sbr.rel (%p259) target = $region36
        $region35: #{tpu_custom_call.1} parent=11 // pred_region
          _
        $region36: #{tpu_custom_call.1} parent=11 // pred_fallthru
          _
      $region12: #{tpu_custom_call.1} parent=5 // pred_fallthru
        _
      %p262 = scmp.lt.s32.totalorder %s21, 2
      // Predicated region
      $region37: #{tpu_custom_call.1} parent=5 // pred_check
        %p263 = pneg %p262
      $region38: #{tpu_custom_call.1} parent=5 // pred_check_branch
        %265 = sbr.rel (%p263) target = $region40
      $region39: #{tpu_custom_call.1} parent=5 // pred_region
        // Predicated region
        $region41: #{tpu_custom_call.1} parent=39 // pred_check
          %p266 = pneg %p41
        $region42: #{tpu_custom_call.1} parent=39 // pred_check_branch
          %268 = sbr.rel (%p266) target = $region44
        $region43: #{tpu_custom_call.1} parent=39 // pred_region
          %s269 = sand.u32 %s31, 1
          %s270 = scalar_lea.sflag [#allocation3], %s269
          %s271 = sand.u32 %s31, 1
          %s272 = smul.addr %s271, 64
          %s273 = scalar_lea.vmem [#allocation2], %s272
          %s274 = smul.u32 16, %s21
          %s276 = ssub.s32 1024, 1024
          %277 = vsyncadd %s270, %s276
          %s278 = smul.addr %s274, 64
          %s279 = scalar_lea.hbm %s0, %s278
          %s280 = sshll.u32 %s273, 4
          %s281 = int_to_ptr.vmem [resolvable:$true] %s280
          %286 = dma.hbm_to_vmem [thread:$0]  %s279, 1024, %s281, %s270, 64, 64, 4
        $region44: #{tpu_custom_call.1} parent=39 // pred_fallthru
          _
      $region40: #{tpu_custom_call.1} parent=5 // pred_fallthru
        _
      %p287 = scmp.le.s32.totalorder 1, %s21
      %p288 = scmp.lt.s32.totalorder %s21, 3
      %p289 = pnand %p287, %p288
      %p290 = pneg %p289
      // Predicated region
      $region45: #{tpu_custom_call.1} parent=5 // pred_check
        _
      $region46: #{tpu_custom_call.1} parent=5 // pred_check_branch
        %292 = sbr.rel (%p289) target = $region48
      $region47: #{tpu_custom_call.1} parent=5 // pred_region
        %s293 = ssub.s32 %s21, 1
        %s294 = sand.u32 %s34, 1
        %s295 = scalar_lea.sflag [#allocation3], %s294
        %s296 = sand.u32 %s34, 1
        %s297 = smul.addr %s296, 64
        %s298 = scalar_lea.vmem [#allocation2], %s297
        // Predicated region
        $region49: #{tpu_custom_call.1} parent=47 // pred_check
          %p299 = pneg %p47
        $region50: #{tpu_custom_call.1} parent=47 // pred_check_branch
          %301 = sbr.rel (%p299) target = $region52
        $region51: #{tpu_custom_call.1} parent=47 // pred_region
          %302 = dma.done %s295, 1024
        $region52: #{tpu_custom_call.1} parent=47 // pred_fallthru
          _
        // Predicated region
        $region53: #{tpu_custom_call.1} parent=47 // pred_check
          %p303 = pneg %p68
        $region54: #{tpu_custom_call.1} parent=47 // pred_check_branch
          %305 = sbr.rel (%p303) target = $region56
        $region55: #{tpu_custom_call.1} parent=47 // pred_region
          %306 = dma.done [#allocation6], 1024
        $region56: #{tpu_custom_call.1} parent=47 // pred_fallthru
          _
        // Predicated region
        $region57: #{tpu_custom_call.1} parent=47 // pred_check
          %p307 = pneg %p110
        $region58: #{tpu_custom_call.1} parent=47 // pred_check_branch
          %309 = sbr.rel (%p307) target = $region60
        $region59: #{tpu_custom_call.1} parent=47 // pred_region
          %310 = dma.done [#allocation6], 1024
        $region60: #{tpu_custom_call.1} parent=47 // pred_fallthru
          _
        // Predicated region
        $region61: #{tpu_custom_call.1} parent=47 // pred_check
          %p311 = pneg %p152
        $region62: #{tpu_custom_call.1} parent=47 // pred_check_branch
          %313 = sbr.rel (%p311) target = $region64
        $region63: #{tpu_custom_call.1} parent=47 // pred_region
          %314 = dma.done [#allocation9], 1024
        $region64: #{tpu_custom_call.1} parent=47 // pred_fallthru
          _
        %s315 = sand.u32 %s34, 1
        %s316 = scalar_lea.sflag [#allocation3], %s315
        %s317 = sand.u32 %s34, 1
        %s318 = smul.addr %s317, 64
        %s319 = scalar_lea.vmem [#allocation2], %s318
        %p320 = pneg %p47
        %p321 = pneg %p44
        %p322 = pneg %p68
        %p323 = pneg %p65
        %p324 = pneg %p89
        %p325 = pneg %p86
        %p326 = pneg %p110
        %p327 = pneg %p107
        %p328 = pneg %p131
        %p329 = pneg %p128
        %p330 = pneg %p152
        %p331 = pneg %p149
        %p332 = pneg %p173
        %p333 = pneg %p170
        %p334 = pneg %p199
        %p335 = pneg %p196
        %s336 = sand.u32 %s186, 1
        %s337 = scalar_lea.sflag [#allocation4], %s336
        %s338 = sand.u32 %s186, 1
        %s339 = smul.addr %s338, 128
        %s340 = scalar_lea.vmem [#allocation10], %s339
        %s341 = smul.u32 16, %s26
        %s342 = smul.u32 16, %s26
        %v344 = vld [vmem:[%s298] sm:$0xf]
        %v345 = vld [vmem:[%s298 + $0x4] sm:$0xf]
        %v346 = vld [vmem:[%s298 + $0x8] sm:$0xf]
        %v347 = vld [vmem:[%s298 + $0xc] sm:$0xf]
        %v348 = vld [vmem:[%s298 + $0x10] sm:$0xf]
        %v349 = vld [vmem:[%s298 + $0x14] sm:$0xf]
        %v350 = vld [vmem:[%s298 + $0x18] sm:$0xf]
        %v351 = vld [vmem:[%s298 + $0x1c] sm:$0xf]
        %v352 = vld [vmem:[%s298 + $0x20] sm:$0xf]
        %v353 = vld [vmem:[%s298 + $0x24] sm:$0xf]
        %v354 = vld [vmem:[%s298 + $0x28] sm:$0xf]
        %v355 = vld [vmem:[%s298 + $0x2c] sm:$0xf]
        %v356 = vld [vmem:[%s298 + $0x30] sm:$0xf]
        %v357 = vld [vmem:[%s298 + $0x34] sm:$0xf]
        %v358 = vld [vmem:[%s298 + $0x38] sm:$0xf]
        %v359 = vld [vmem:[%s298 + $0x3c] sm:$0xf]
        %v360 = vld [vmem:[#allocation5] sm:$0xf]
        %v361 = vld [vmem:[#allocation5 + $0x4] sm:$0xf]
        %v362 = vld [vmem:[#allocation5 + $0x8] sm:$0xf]
        %v363 = vld [vmem:[#allocation5 + $0xc] sm:$0xf]
        %v364 = vld [vmem:[#allocation5 + $0x10] sm:$0xf]
        %v365 = vld [vmem:[#allocation5 + $0x14] sm:$0xf]
        %v366 = vld [vmem:[#allocation5 + $0x18] sm:$0xf]
        %v367 = vld [vmem:[#allocation5 + $0x1c] sm:$0xf]
        %v368 = vld [vmem:[#allocation5 + $0x20] sm:$0xf]
        %v369 = vld [vmem:[#allocation5 + $0x24] sm:$0xf]
        %v370 = vld [vmem:[#allocation5 + $0x28] sm:$0xf]
        %v371 = vld [vmem:[#allocation5 + $0x2c] sm:$0xf]
        %v372 = vld [vmem:[#allocation5 + $0x30] sm:$0xf]
        %v373 = vld [vmem:[#allocation5 + $0x34] sm:$0xf]
        %v374 = vld [vmem:[#allocation5 + $0x38] sm:$0xf]
        %v375 = vld [vmem:[#allocation5 + $0x3c] sm:$0xf]
        %v376 = vld [vmem:[%s2] sm:$0x1]
        %v378 = vlaneseq
        %v379 = vshrl.u32 %v378, 7
        %v380 = vsub.s32 0, %v379
        %v381 = vrot.slane %v376, %v380
        %v399 = vunpack.c.l.b16 %v344
        %v400 = vunpack.c.l.b16 %v345
        %v401 = vunpack.c.l.b16 %v346
        %v402 = vunpack.c.l.b16 %v347
        %v403 = vunpack.c.l.b16 %v348
        %v404 = vunpack.c.l.b16 %v349
        %v405 = vunpack.c.l.b16 %v350
        %v406 = vunpack.c.l.b16 %v351
        %v407 = vunpack.c.l.b16 %v352
        %v408 = vunpack.c.l.b16 %v353
        %v409 = vunpack.c.l.b16 %v354
        %v410 = vunpack.c.l.b16 %v355
        %v411 = vunpack.c.l.b16 %v356
        %v412 = vunpack.c.l.b16 %v357
        %v413 = vunpack.c.l.b16 %v358
        %v414 = vunpack.c.l.b16 %v359
        %v415 = vpack.c.b16 %v400, %v399
        %v416 = vpack.c.b16 %v402, %v401
        %v417 = vpack.c.b16 %v404, %v403
        %v418 = vpack.c.b16 %v406, %v405
        %v419 = vpack.c.b16 %v408, %v407
        %v420 = vpack.c.b16 %v410, %v409
        %v421 = vpack.c.b16 %v412, %v411
        %v422 = vpack.c.b16 %v414, %v413
        %v447 = vunpack.c.l.b16 %v360
        %v448 = vunpack.c.l.b16 %v361
        %v449 = vunpack.c.l.b16 %v362
        %v450 = vunpack.c.l.b16 %v363
        %v451 = vunpack.c.l.b16 %v364
        %v452 = vunpack.c.l.b16 %v365
        %v453 = vunpack.c.l.b16 %v366
        %v454 = vunpack.c.l.b16 %v367
        %v455 = vunpack.c.l.b16 %v368
        %v456 = vunpack.c.l.b16 %v369
        %v457 = vunpack.c.l.b16 %v370
        %v458 = vunpack.c.l.b16 %v371
        %v459 = vunpack.c.l.b16 %v372
        %v460 = vunpack.c.l.b16 %v373
        %v461 = vunpack.c.l.b16 %v374
        %v462 = vunpack.c.l.b16 %v375
        %v463 = vpack.c.b16 %v448, %v447
        %v464 = vpack.c.b16 %v450, %v449
        %v465 = vpack.c.b16 %v452, %v451
        %v466 = vpack.c.b16 %v454, %v453
        %v467 = vpack.c.b16 %v456, %v455
        %v468 = vpack.c.b16 %v458, %v457
        %v469 = vpack.c.b16 %v460, %v459
        %v470 = vpack.c.b16 %v462, %v461
        %479 = vmatprep.subr.bf16.mxu0 0
        %480 = vmatpush1.bf16.msra.mxu0 %v463
        %481 = vmatprep.subr.bf16.mxu0 0
        %482 = vmatpush1.bf16.msra.mxu0 %v464
        %483 = vmatprep.subr.bf16.mxu0 0
        %484 = vmatpush1.bf16.msra.mxu0 %v465
        %485 = vmatprep.subr.bf16.mxu0 0
        %486 = vmatpush1.bf16.msra.mxu0 %v466
        %487 = vmatprep.subr.bf16.mxu0 0
        %488 = vmatpush1.bf16.msra.mxu0 %v467
        %489 = vmatprep.subr.bf16.mxu0 0
        %490 = vmatpush1.bf16.msra.mxu0 %v468
        %491 = vmatprep.subr.bf16.mxu0 0
        %492 = vmatpush1.bf16.msra.mxu0 %v469
        %493 = vmatprep.subr.bf16.mxu0 0
        %494 = vmatpush1.bf16.msra.mxu0 %v470
        %495 = vmatprep.subr.bf16.mxu0 0
        %496 = vmatpush1.bf16.msra.mxu0 0
        %497 = vmatprep.subr.bf16.mxu0 0
        %498 = vmatpush1.bf16.msra.mxu0 0
        %499 = vmatprep.subr.bf16.mxu0 0
        %500 = vmatpush1.bf16.msra.mxu0 0
        %501 = vmatprep.subr.bf16.mxu0 0
        %502 = vmatpush1.bf16.msra.mxu0 0
        %503 = vmatprep.subr.bf16.mxu0 0
        %504 = vmatpush1.bf16.msra.mxu0 0
        %505 = vmatprep.subr.bf16.mxu0 0
        %506 = vmatpush1.bf16.msra.mxu0 0
        %507 = vmatprep.subr.bf16.mxu0 0
        %508 = vmatpush1.bf16.msra.mxu0 0
        %509 = vmatprep.subr.bf16.mxu0 0
        %510 = vmatpush1.bf16.msra.mxu0 0
        %511 = vmatprep.mubr.bf16.mxu0 0
        %512 = vmatmul.mubr.bf16.gmra.mrb[0].mxu0 %v415
        %v513 = vpop.f32.mrb[0].mxu0
        %v514 = vadd.f32 %v381, %v513
        %v515 = vpop.f32.mrb[0].mxu0
        %v516 = vpop.f32.mrb[0].mxu0
        %v517 = vadd.f32 %v381, %v516
        %v518 = vpop.f32.mrb[0].mxu0
        %519 = vmatprep.mubr.bf16.mxu0 0
        %520 = vmatmul.mubr.bf16.gmra.mrb[0].mxu0 %v416
        %v521 = vpop.f32.mrb[0].mxu0
        %v522 = vadd.f32 %v381, %v521
        %v523 = vpop.f32.mrb[0].mxu0
        %v524 = vpop.f32.mrb[0].mxu0
        %v525 = vadd.f32 %v381, %v524
        %v526 = vpop.f32.mrb[0].mxu0
        %527 = vmatprep.mubr.bf16.mxu0 0
        %528 = vmatmul.mubr.bf16.gmra.mrb[0].mxu0 %v417
        %v529 = vpop.f32.mrb[0].mxu0
        %v530 = vadd.f32 %v381, %v529
        %v531 = vpop.f32.mrb[0].mxu0
        %v532 = vpop.f32.mrb[0].mxu0
        %v533 = vadd.f32 %v381, %v532
        %v534 = vpop.f32.mrb[0].mxu0
        %535 = vmatprep.mubr.bf16.mxu0 0
        %536 = vmatmul.mubr.bf16.gmra.mrb[0].mxu0 %v418
        %v537 = vpop.f32.mrb[0].mxu0
        %v538 = vadd.f32 %v381, %v537
        %v539 = vpop.f32.mrb[0].mxu0
        %v540 = vpop.f32.mrb[0].mxu0
        %v541 = vadd.f32 %v381, %v540
        %v542 = vpop.f32.mrb[0].mxu0
        %543 = vmatprep.mubr.bf16.mxu0 0
        %544 = vmatmul.mubr.bf16.gmra.mrb[0].mxu0 %v419
        %v545 = vpop.f32.mrb[0].mxu0
        %v546 = vadd.f32 %v381, %v545
        %v547 = vpop.f32.mrb[0].mxu0
        %v548 = vpop.f32.mrb[0].mxu0
        %v549 = vadd.f32 %v381, %v548
        %v550 = vpop.f32.mrb[0].mxu0
        %551 = vmatprep.mubr.bf16.mxu0 0
        %552 = vmatmul.mubr.bf16.gmra.mrb[0].mxu0 %v420
        %v553 = vpop.f32.mrb[0].mxu0
        %v554 = vadd.f32 %v381, %v553
        %v555 = vpop.f32.mrb[0].mxu0
        %v556 = vpop.f32.mrb[0].mxu0
        %v557 = vadd.f32 %v381, %v556
        %v558 = vpop.f32.mrb[0].mxu0
        %559 = vmatprep.mubr.bf16.mxu0 0
        %560 = vmatmul.mubr.bf16.gmra.mrb[0].mxu0 %v421
        %v561 = vpop.f32.mrb[0].mxu0
        %v562 = vadd.f32 %v381, %v561
        %v563 = vpop.f32.mrb[0].mxu0
        %v564 = vpop.f32.mrb[0].mxu0
        %v565 = vadd.f32 %v381, %v564
        %v566 = vpop.f32.mrb[0].mxu0
        %567 = vmatprep.mubr.bf16.mxu0 0
        %568 = vmatmul.mubr.bf16.gmra.mrb[0].mxu0 %v422
        %v569 = vpop.f32.mrb[0].mxu0
        %v570 = vadd.f32 %v381, %v569
        %v571 = vpop.f32.mrb[0].mxu0
        %v572 = vpop.f32.mrb[0].mxu0
        %v573 = vadd.f32 %v381, %v572
        %v574 = vpop.f32.mrb[0].mxu0
        %575 = vdwg.mxu0
        %v576 = vmax.f32 %v514, 0.0
        %v577 = vmax.f32 %v517, 0.0
        %v578 = vmax.f32 %v522, 0.0
        %v579 = vmax.f32 %v525, 0.0
        %v580 = vmax.f32 %v530, 0.0
        %v581 = vmax.f32 %v533, 0.0
        %v582 = vmax.f32 %v538, 0.0
        %v583 = vmax.f32 %v541, 0.0
        %v584 = vmax.f32 %v546, 0.0
        %v585 = vmax.f32 %v549, 0.0
        %v586 = vmax.f32 %v554, 0.0
        %v587 = vmax.f32 %v557, 0.0
        %v588 = vmax.f32 %v562, 0.0
        %v589 = vmax.f32 %v565, 0.0
        %v590 = vmax.f32 %v570, 0.0
        %v591 = vmax.f32 %v573, 0.0
        %v592 = vpack.c.bf16 %v577, %v576
        %v593 = vpack.c.bf16 %v579, %v578
        %v594 = vpack.c.bf16 %v581, %v580
        %v595 = vpack.c.bf16 %v583, %v582
        %v596 = vpack.c.bf16 %v585, %v584
        %v597 = vpack.c.bf16 %v587, %v586
        %v598 = vpack.c.bf16 %v589, %v588
        %v599 = vpack.c.bf16 %v591, %v590
        %v600 = vld [vmem:[#allocation7] sm:$0xf]
        %v601 = vld [vmem:[#allocation7 + $0x4] sm:$0xf]
        %v602 = vld [vmem:[#allocation7 + $0x8] sm:$0xf]
        %v603 = vld [vmem:[#allocation7 + $0xc] sm:$0xf]
        %v604 = vld [vmem:[#allocation7 + $0x10] sm:$0xf]
        %v605 = vld [vmem:[#allocation7 + $0x14] sm:$0xf]
        %v606 = vld [vmem:[#allocation7 + $0x18] sm:$0xf]
        %v607 = vld [vmem:[#allocation7 + $0x1c] sm:$0xf]
        %v608 = vld [vmem:[#allocation7 + $0x20] sm:$0xf]
        %v609 = vld [vmem:[#allocation7 + $0x24] sm:$0xf]
        %v610 = vld [vmem:[#allocation7 + $0x28] sm:$0xf]
        %v611 = vld [vmem:[#allocation7 + $0x2c] sm:$0xf]
        %v612 = vld [vmem:[#allocation7 + $0x30] sm:$0xf]
        %v613 = vld [vmem:[#allocation7 + $0x34] sm:$0xf]
        %v614 = vld [vmem:[#allocation7 + $0x38] sm:$0xf]
        %v615 = vld [vmem:[#allocation7 + $0x3c] sm:$0xf]
        %v616 = vld [vmem:[%s4] sm:$0x1]
        %v618 = vlaneseq
        %v619 = vshrl.u32 %v618, 7
        %v620 = vsub.s32 0, %v619
        %v621 = vrot.slane %v616, %v620
        %v639 = vunpack.c.l.b16 %v600
        %v640 = vunpack.c.l.b16 %v601
        %v641 = vunpack.c.l.b16 %v602
        %v642 = vunpack.c.l.b16 %v603
        %v643 = vunpack.c.l.b16 %v604
        %v644 = vunpack.c.l.b16 %v605
        %v645 = vunpack.c.l.b16 %v606
        %v646 = vunpack.c.l.b16 %v607
        %v647 = vunpack.c.l.b16 %v608
        %v648 = vunpack.c.l.b16 %v609
        %v649 = vunpack.c.l.b16 %v610
        %v650 = vunpack.c.l.b16 %v611
        %v651 = vunpack.c.l.b16 %v612
        %v652 = vunpack.c.l.b16 %v613
        %v653 = vunpack.c.l.b16 %v614
        %v654 = vunpack.c.l.b16 %v615
        %v655 = vpack.c.b16 %v640, %v639
        %v656 = vpack.c.b16 %v642, %v641
        %v657 = vpack.c.b16 %v644, %v643
        %v658 = vpack.c.b16 %v646, %v645
        %v659 = vpack.c.b16 %v648, %v647
        %v660 = vpack.c.b16 %v650, %v649
        %v661 = vpack.c.b16 %v652, %v651
        %v662 = vpack.c.b16 %v654, %v653
        %671 = vmatprep.subr.bf16.mxu0 0
        %672 = vmatpush1.bf16.msra.mxu0 %v655
        %673 = vmatprep.subr.bf16.mxu0 0
        %674 = vmatpush1.bf16.msra.mxu0 %v656
        %675 = vmatprep.subr.bf16.mxu0 0
        %676 = vmatpush1.bf16.msra.mxu0 %v657
        %677 = vmatprep.subr.bf16.mxu0 0
        %678 = vmatpush1.bf16.msra.mxu0 %v658
        %679 = vmatprep.subr.bf16.mxu0 0
        %680 = vmatpush1.bf16.msra.mxu0 %v659
        %681 = vmatprep.subr.bf16.mxu0 0
        %682 = vmatpush1.bf16.msra.mxu0 %v660
        %683 = vmatprep.subr.bf16.mxu0 0
        %684 = vmatpush1.bf16.msra.mxu0 %v661
        %685 = vmatprep.subr.bf16.mxu0 0
        %686 = vmatpush1.bf16.msra.mxu0 %v662
        %687 = vmatprep.subr.bf16.mxu0 0
        %688 = vmatpush1.bf16.msra.mxu0 0
        %689 = vmatprep.subr.bf16.mxu0 0
        %690 = vmatpush1.bf16.msra.mxu0 0
        %691 = vmatprep.subr.bf16.mxu0 0
        %692 = vmatpush1.bf16.msra.mxu0 0
        %693 = vmatprep.subr.bf16.mxu0 0
        %694 = vmatpush1.bf16.msra.mxu0 0
        %695 = vmatprep.subr.bf16.mxu0 0
        %696 = vmatpush1.bf16.msra.mxu0 0
        %697 = vmatprep.subr.bf16.mxu0 0
        %698 = vmatpush1.bf16.msra.mxu0 0
        %699 = vmatprep.subr.bf16.mxu0 0
        %700 = vmatpush1.bf16.msra.mxu0 0
        %701 = vmatprep.subr.bf16.mxu0 0
        %702 = vmatpush1.bf16.msra.mxu0 0
        %703 = vmatprep.mubr.bf16.mxu0 0
        %704 = vmatmul.mubr.bf16.gmra.mrb[0].mxu0 %v592
        %v705 = vpop.f32.mrb[0].mxu0
        %v706 = vadd.f32 %v621, %v705
        %v707 = vpop.f32.mrb[0].mxu0
        %v708 = vpop.f32.mrb[0].mxu0
        %v709 = vadd.f32 %v621, %v708
        %v710 = vpop.f32.mrb[0].mxu0
        %711 = vmatprep.mubr.bf16.mxu0 0
        %712 = vmatmul.mubr.bf16.gmra.mrb[0].mxu0 %v593
        %v713 = vpop.f32.mrb[0].mxu0
        %v714 = vadd.f32 %v621, %v713
        %v715 = vpop.f32.mrb[0].mxu0
        %v716 = vpop.f32.mrb[0].mxu0
        %v717 = vadd.f32 %v621, %v716
        %v718 = vpop.f32.mrb[0].mxu0
        %719 = vmatprep.mubr.bf16.mxu0 0
        %720 = vmatmul.mubr.bf16.gmra.mrb[0].mxu0 %v594
        %v721 = vpop.f32.mrb[0].mxu0
        %v722 = vadd.f32 %v621, %v721
        %v723 = vpop.f32.mrb[0].mxu0
        %v724 = vpop.f32.mrb[0].mxu0
        %v725 = vadd.f32 %v621, %v724
        %v726 = vpop.f32.mrb[0].mxu0
        %727 = vmatprep.mubr.bf16.mxu0 0
        %728 = vmatmul.mubr.bf16.gmra.mrb[0].mxu0 %v595
        %v729 = vpop.f32.mrb[0].mxu0
        %v730 = vadd.f32 %v621, %v729
        %v731 = vpop.f32.mrb[0].mxu0
        %v732 = vpop.f32.mrb[0].mxu0
        %v733 = vadd.f32 %v621, %v732
        %v734 = vpop.f32.mrb[0].mxu0
        %735 = vmatprep.mubr.bf16.mxu0 0
        %736 = vmatmul.mubr.bf16.gmra.mrb[0].mxu0 %v596
        %v737 = vpop.f32.mrb[0].mxu0
        %v738 = vadd.f32 %v621, %v737
        %v739 = vpop.f32.mrb[0].mxu0
        %v740 = vpop.f32.mrb[0].mxu0
        %v741 = vadd.f32 %v621, %v740
        %v742 = vpop.f32.mrb[0].mxu0
        %743 = vmatprep.mubr.bf16.mxu0 0
        %744 = vmatmul.mubr.bf16.gmra.mrb[0].mxu0 %v597
        %v745 = vpop.f32.mrb[0].mxu0
        %v746 = vadd.f32 %v621, %v745
        %v747 = vpop.f32.mrb[0].mxu0
        %v748 = vpop.f32.mrb[0].mxu0
        %v749 = vadd.f32 %v621, %v748
        %v750 = vpop.f32.mrb[0].mxu0
        %751 = vmatprep.mubr.bf16.mxu0 0
        %752 = vmatmul.mubr.bf16.gmra.mrb[0].mxu0 %v598
        %v753 = vpop.f32.mrb[0].mxu0
        %v754 = vadd.f32 %v621, %v753
        %v755 = vpop.f32.mrb[0].mxu0
        %v756 = vpop.f32.mrb[0].mxu0
        %v757 = vadd.f32 %v621, %v756
        %v758 = vpop.f32.mrb[0].mxu0
        %759 = vmatprep.mubr.bf16.mxu0 0
        %760 = vmatmul.mubr.bf16.gmra.mrb[0].mxu0 %v599
        %v761 = vpop.f32.mrb[0].mxu0
        %v762 = vadd.f32 %v621, %v761
        %v763 = vpop.f32.mrb[0].mxu0
        %v764 = vpop.f32.mrb[0].mxu0
        %v765 = vadd.f32 %v621, %v764
        %v766 = vpop.f32.mrb[0].mxu0
        %767 = vdwg.mxu0
        %v768 = vmax.f32 %v706, 0.0
        %v769 = vmax.f32 %v709, 0.0
        %v770 = vmax.f32 %v714, 0.0
        %v771 = vmax.f32 %v717, 0.0
        %v772 = vmax.f32 %v722, 0.0
        %v773 = vmax.f32 %v725, 0.0
        %v774 = vmax.f32 %v730, 0.0
        %v775 = vmax.f32 %v733, 0.0
        %v776 = vmax.f32 %v738, 0.0
        %v777 = vmax.f32 %v741, 0.0
        %v778 = vmax.f32 %v746, 0.0
        %v779 = vmax.f32 %v749, 0.0
        %v780 = vmax.f32 %v754, 0.0
        %v781 = vmax.f32 %v757, 0.0
        %v782 = vmax.f32 %v762, 0.0
        %v783 = vmax.f32 %v765, 0.0
        %v784 = vpack.c.bf16 %v769, %v768
        %v785 = vpack.c.bf16 %v771, %v770
        %v786 = vpack.c.bf16 %v773, %v772
        %v787 = vpack.c.bf16 %v775, %v774
        %v788 = vpack.c.bf16 %v777, %v776
        %v789 = vpack.c.bf16 %v779, %v778
        %v790 = vpack.c.bf16 %v781, %v780
        %v791 = vpack.c.bf16 %v783, %v782
        %v792 = vld [vmem:[#allocation8] sm:$0xf]
        %v793 = vld [vmem:[#allocation8 + $0x4] sm:$0xf]
        %v794 = vld [vmem:[#allocation8 + $0x8] sm:$0xf]
        %v795 = vld [vmem:[#allocation8 + $0xc] sm:$0xf]
        %v796 = vld [vmem:[#allocation8 + $0x10] sm:$0xf]
        %v797 = vld [vmem:[#allocation8 + $0x14] sm:$0xf]
        %v798 = vld [vmem:[#allocation8 + $0x18] sm:$0xf]
        %v799 = vld [vmem:[#allocation8 + $0x1c] sm:$0xf]
        %v800 = vld [vmem:[#allocation8 + $0x20] sm:$0xf]
        %v801 = vld [vmem:[#allocation8 + $0x24] sm:$0xf]
        %v802 = vld [vmem:[#allocation8 + $0x28] sm:$0xf]
        %v803 = vld [vmem:[#allocation8 + $0x2c] sm:$0xf]
        %v804 = vld [vmem:[#allocation8 + $0x30] sm:$0xf]
        %v805 = vld [vmem:[#allocation8 + $0x34] sm:$0xf]
        %v806 = vld [vmem:[#allocation8 + $0x38] sm:$0xf]
        %v807 = vld [vmem:[#allocation8 + $0x3c] sm:$0xf]
        %v808 = vld [vmem:[%s6] sm:$0x1]
        %v810 = vlaneseq
        %v811 = vshrl.u32 %v810, 7
        %v812 = vsub.s32 0, %v811
        %v813 = vrot.slane %v808, %v812
        %v831 = vunpack.c.l.b16 %v792
        %v832 = vunpack.c.l.b16 %v793
        %v833 = vunpack.c.l.b16 %v794
        %v834 = vunpack.c.l.b16 %v795
        %v835 = vunpack.c.l.b16 %v796
        %v836 = vunpack.c.l.b16 %v797
        %v837 = vunpack.c.l.b16 %v798
        %v838 = vunpack.c.l.b16 %v799
        %v839 = vunpack.c.l.b16 %v800
        %v840 = vunpack.c.l.b16 %v801
        %v841 = vunpack.c.l.b16 %v802
        %v842 = vunpack.c.l.b16 %v803
        %v843 = vunpack.c.l.b16 %v804
        %v844 = vunpack.c.l.b16 %v805
        %v845 = vunpack.c.l.b16 %v806
        %v846 = vunpack.c.l.b16 %v807
        %v847 = vpack.c.b16 %v832, %v831
        %v848 = vpack.c.b16 %v834, %v833
        %v849 = vpack.c.b16 %v836, %v835
        %v850 = vpack.c.b16 %v838, %v837
        %v851 = vpack.c.b16 %v840, %v839
        %v852 = vpack.c.b16 %v842, %v841
        %v853 = vpack.c.b16 %v844, %v843
        %v854 = vpack.c.b16 %v846, %v845
        %863 = vmatprep.subr.bf16.mxu0 0
        %864 = vmatpush1.bf16.msra.mxu0 %v847
        %865 = vmatprep.subr.bf16.mxu0 0
        %866 = vmatpush1.bf16.msra.mxu0 %v848
        %867 = vmatprep.subr.bf16.mxu0 0
        %868 = vmatpush1.bf16.msra.mxu0 %v849
        %869 = vmatprep.subr.bf16.mxu0 0
        %870 = vmatpush1.bf16.msra.mxu0 %v850
        %871 = vmatprep.subr.bf16.mxu0 0
        %872 = vmatpush1.bf16.msra.mxu0 %v851
        %873 = vmatprep.subr.bf16.mxu0 0
        %874 = vmatpush1.bf16.msra.mxu0 %v852
        %875 = vmatprep.subr.bf16.mxu0 0
        %876 = vmatpush1.bf16.msra.mxu0 %v853
        %877 = vmatprep.subr.bf16.mxu0 0
        %878 = vmatpush1.bf16.msra.mxu0 %v854
        %879 = vmatprep.subr.bf16.mxu0 0
        %880 = vmatpush1.bf16.msra.mxu0 0
        %881 = vmatprep.subr.bf16.mxu0 0
        %882 = vmatpush1.bf16.msra.mxu0 0
        %883 = vmatprep.subr.bf16.mxu0 0
        %884 = vmatpush1.bf16.msra.mxu0 0
        %885 = vmatprep.subr.bf16.mxu0 0
        %886 = vmatpush1.bf16.msra.mxu0 0
        %887 = vmatprep.subr.bf16.mxu0 0
        %888 = vmatpush1.bf16.msra.mxu0 0
        %889 = vmatprep.subr.bf16.mxu0 0
        %890 = vmatpush1.bf16.msra.mxu0 0
        %891 = vmatprep.subr.bf16.mxu0 0
        %892 = vmatpush1.bf16.msra.mxu0 0
        %893 = vmatprep.subr.bf16.mxu0 0
        %894 = vmatpush1.bf16.msra.mxu0 0
        %895 = vmatprep.mubr.bf16.mxu0 0
        %896 = vmatmul.mubr.bf16.gmra.mrb[0].mxu0 %v784
        %v897 = vpop.f32.mrb[0].mxu0
        %v898 = vadd.f32 %v813, %v897
        %v899 = vpop.f32.mrb[0].mxu0
        %v900 = vpop.f32.mrb[0].mxu0
        %v901 = vadd.f32 %v813, %v900
        %v902 = vpop.f32.mrb[0].mxu0
        %903 = vmatprep.mubr.bf16.mxu0 0
        %904 = vmatmul.mubr.bf16.gmra.mrb[0].mxu0 %v785
        %v905 = vpop.f32.mrb[0].mxu0
        %v906 = vadd.f32 %v813, %v905
        %v907 = vpop.f32.mrb[0].mxu0
        %v908 = vpop.f32.mrb[0].mxu0
        %v909 = vadd.f32 %v813, %v908
        %v910 = vpop.f32.mrb[0].mxu0
        %911 = vmatprep.mubr.bf16.mxu0 0
        %912 = vmatmul.mubr.bf16.gmra.mrb[0].mxu0 %v786
        %v913 = vpop.f32.mrb[0].mxu0
        %v914 = vadd.f32 %v813, %v913
        %v915 = vpop.f32.mrb[0].mxu0
        %v916 = vpop.f32.mrb[0].mxu0
        %v917 = vadd.f32 %v813, %v916
        %v918 = vpop.f32.mrb[0].mxu0
        %919 = vmatprep.mubr.bf16.mxu0 0
        %920 = vmatmul.mubr.bf16.gmra.mrb[0].mxu0 %v787
        %v921 = vpop.f32.mrb[0].mxu0
        %v922 = vadd.f32 %v813, %v921
        %v923 = vpop.f32.mrb[0].mxu0
        %v924 = vpop.f32.mrb[0].mxu0
        %v925 = vadd.f32 %v813, %v924
        %v926 = vpop.f32.mrb[0].mxu0
        %927 = vmatprep.mubr.bf16.mxu0 0
        %928 = vmatmul.mubr.bf16.gmra.mrb[0].mxu0 %v788
        %v929 = vpop.f32.mrb[0].mxu0
        %v930 = vadd.f32 %v813, %v929
        %v931 = vpop.f32.mrb[0].mxu0
        %v932 = vpop.f32.mrb[0].mxu0
        %v933 = vadd.f32 %v813, %v932
        %v934 = vpop.f32.mrb[0].mxu0
        %935 = vmatprep.mubr.bf16.mxu0 0
        %936 = vmatmul.mubr.bf16.gmra.mrb[0].mxu0 %v789
        %v937 = vpop.f32.mrb[0].mxu0
        %v938 = vadd.f32 %v813, %v937
        %v939 = vpop.f32.mrb[0].mxu0
        %v940 = vpop.f32.mrb[0].mxu0
        %v941 = vadd.f32 %v813, %v940
        %v942 = vpop.f32.mrb[0].mxu0
        %943 = vmatprep.mubr.bf16.mxu0 0
        %944 = vmatmul.mubr.bf16.gmra.mrb[0].mxu0 %v790
        %v945 = vpop.f32.mrb[0].mxu0
        %v946 = vadd.f32 %v813, %v945
        %v947 = vpop.f32.mrb[0].mxu0
        %v948 = vpop.f32.mrb[0].mxu0
        %v949 = vadd.f32 %v813, %v948
        %v950 = vpop.f32.mrb[0].mxu0
        %951 = vmatprep.mubr.bf16.mxu0 0
        %952 = vmatmul.mubr.bf16.gmra.mrb[0].mxu0 %v791
        %v953 = vpop.f32.mrb[0].mxu0
        %v954 = vadd.f32 %v813, %v953
        %v955 = vpop.f32.mrb[0].mxu0
        %v956 = vpop.f32.mrb[0].mxu0
        %v957 = vadd.f32 %v813, %v956
        %v958 = vpop.f32.mrb[0].mxu0
        %959 = vdwg.mxu0
        %960 = vst [vmem:[%s340] sm:$0xff] %v898
        %961 = vst [vmem:[%s340 + $0x8] sm:$0xff] %v901
        %962 = vst [vmem:[%s340 + $0x10] sm:$0xff] %v906
        %963 = vst [vmem:[%s340 + $0x18] sm:$0xff] %v909
        %964 = vst [vmem:[%s340 + $0x20] sm:$0xff] %v914
        %965 = vst [vmem:[%s340 + $0x28] sm:$0xff] %v917
        %966 = vst [vmem:[%s340 + $0x30] sm:$0xff] %v922
        %967 = vst [vmem:[%s340 + $0x38] sm:$0xff] %v925
        %968 = vst [vmem:[%s340 + $0x40] sm:$0xff] %v930
        %969 = vst [vmem:[%s340 + $0x48] sm:$0xff] %v933
        %970 = vst [vmem:[%s340 + $0x50] sm:$0xff] %v938
        %971 = vst [vmem:[%s340 + $0x58] sm:$0xff] %v941
        %972 = vst [vmem:[%s340 + $0x60] sm:$0xff] %v946
        %973 = vst [vmem:[%s340 + $0x68] sm:$0xff] %v949
        %974 = vst [vmem:[%s340 + $0x70] sm:$0xff] %v954
        %975 = vst [vmem:[%s340 + $0x78] sm:$0xff] %v957
        %s976 = sand.u32 %s186, 1
        %s977 = scalar_lea.sflag [#allocation4], %s976
        %s978 = sand.u32 %s186, 1
        %s979 = smul.addr %s978, 128
        %s980 = scalar_lea.vmem [#allocation10], %s979
        // Predicated region
        $region65: #{tpu_custom_call.1} parent=47 // pred_check
          %p981 = pneg %p196
        $region66: #{tpu_custom_call.1} parent=47 // pred_check_branch
          %983 = sbr.rel (%p981) target = $region68
        $region67: #{tpu_custom_call.1} parent=47 // pred_region
          %s984 = smul.u32 16, %s26
          %s986 = ssub.s32 2048, 2048
          %987 = vsyncadd %s977, %s986
          %s988 = smul.addr %s984, 128
          %s989 = scalar_lea.hbm %s7, %s988
          %s990 = sshll.u32 %s980, 4
          %s991 = int_to_ptr.vmem [resolvable:$true] %s990
          %996 = dma.vmem_to_hbm [thread:$0]  %s991, 2048, %s989, %s977, 128, 128, 8
        $region68: #{tpu_custom_call.1} parent=47 // pred_fallthru
          _
      $region48: #{tpu_custom_call.1} parent=5 // pred_fallthru
        _
      %p997 = scmp.le.s32.totalorder 2, %s21
      // Predicated region
      $region69: #{tpu_custom_call.1} parent=5 // pred_check
        %p998 = pneg %p997
      $region70: #{tpu_custom_call.1} parent=5 // pred_check_branch
        %1000 = sbr.rel (%p998) target = $region72
      $region71: #{tpu_custom_call.1} parent=5 // pred_region
        %s1001 = ssub.s32 %s21, 2
        // Predicated region
        $region73: #{tpu_custom_call.1} parent=71 // pred_check
          %p1002 = pneg %p202
        $region74: #{tpu_custom_call.1} parent=71 // pred_check_branch
          %1004 = sbr.rel (%p1002) target = $region76
        $region75: #{tpu_custom_call.1} parent=71 // pred_region
          %s1005 = sand.u32 %s187, 1
          %s1006 = scalar_lea.sflag [#allocation4], %s1005
          %s1007 = sand.u32 %s187, 1
          %s1008 = smul.addr %s1007, 128
          %s1009 = scalar_lea.vmem [#allocation10], %s1008
          %1010 = dma.done %s1006, 2048
        $region76: #{tpu_custom_call.1} parent=71 // pred_fallthru
          _
      $region72: #{tpu_custom_call.1} parent=5 // pred_fallthru
        _
    $region6: #{tpu_custom_call.1} parent=1 // loop_footer
      %s25 = sadd.s32 1, %s21
    $region7: #{tpu_custom_call.1} parent=1 // loop_footer_branch
      %20 = sbr.rel target = $region3
    $region8: #{tpu_custom_call.1} parent=1 // loop_exit
      _
    %1011 = vsyncpa [#allocation3], 1
    %s1012 = scalar_lea.sflag [#allocation3], 1
    %1013 = vsyncpa %s1012, 1
    %1014 = vsyncpa [#allocation6], 1
    %1015 = vsyncpa [#allocation9], 1
    %1016 = vsyncpa [#allocation4], 1
    %s1017 = scalar_lea.sflag [#allocation4], 1
    %1018 = vsyncpa %s1017, 1

</llo_original>
